<compile_context>
chip_gen: v7x
topology: tpu7x:2x2x1
jax: 0.10.0
libtpu: 0.0.40
codegen_flags: <defaults>
</compile_context>

<pallas_src>
import math

import jax
import jax.numpy as jnp
from jax.experimental import pallas as pl
from jax.experimental.pallas import tpu as pltpu


# ---------------------------------------------------------------------------
# Kernel
# ---------------------------------------------------------------------------
def _weighted_head_kernel(
    img_ref, txt_ref,                                   # activations (TB, D)
    g_pre_ref, be_pre_ref, w_pre_ref, b_pre_ref,        # preprocess FFLayer
    g_cls_ref, be_cls_ref, w_c1_ref, b_c1_ref,          # classifier OutLayer (LN + Linear1)
    w_c2_ref, b_c2_ref,                                 # classifier Linear2 (lane-padded)
    out_ref,                                            # (TB, n_pad)
    feat_ref,                                           # scratch (TB, 4*D)
):
    f32 = jnp.float32

    def layernorm(x, gamma, beta):
        mu = jnp.mean(x, axis=-1, keepdims=True)
        xc = x - mu
        var = jnp.mean(xc * xc, axis=-1, keepdims=True)
        return xc * jax.lax.rsqrt(var + 1e-5) * gamma + beta

    def gelu(x):
        # exact GELU (erf), same as torch.nn.GELU()
        return 0.5 * x * (1.0 + jax.lax.erf(x * (1.0 / math.sqrt(2.0))))

    img = img_ref[...]
    txt = txt_ref[...]
    D = img.shape[-1]

    # Build the lane-dense (TB, 4*D) feature slab via static-slice stores
    # (avoids an in-kernel concatenate of sub-128-lane pieces).
    feat_ref[:, 0 * D:1 * D] = img
    feat_ref[:, 1 * D:2 * D] = txt
    feat_ref[:, 2 * D:3 * D] = jnp.abs(txt - img)
    feat_ref[:, 3 * D:4 * D] = txt * img
    feat = feat_ref[...]

    # preprocess FFLayer: LayerNorm -> Linear -> GELU -> Dropout(identity, eval)
    h = layernorm(feat, g_pre_ref[...], be_pre_ref[...])
    rep = gelu(jnp.dot(h, w_pre_ref[...], preferred_element_type=f32) + b_pre_ref[...])

    # classifier OutLayer: LayerNorm -> Linear -> GELU -> Linear
    h = layernorm(rep, g_cls_ref[...], be_cls_ref[...])
    h = gelu(jnp.dot(h, w_c1_ref[...], preferred_element_type=f32) + b_c1_ref[...])
    out_ref[...] = jnp.dot(h, w_c2_ref[...], preferred_element_type=f32) + b_c2_ref[...]


# ---------------------------------------------------------------------------
# Wrapper
# ---------------------------------------------------------------------------
def _pick_batch_tile(B):
    # Largest MXU-friendly row tile that evenly divides B (and satisfies the
    # sublane-multiple-of-8 constraint); otherwise take the whole batch.
    for tb in (512, 256, 128, 64, 32, 16, 8):
        if B % tb == 0:
            return tb
    return B


def weighted_head_forward(img, txt, params):
    B, D = img.shape
    in_pre = 4 * D                        # FFLayer in_dim (== hidden_dim as wired)
    M = params["w_pre"].shape[-1]         # middle_dim
    n_outputs = params["w_c2"].shape[-1]

    # Lane-dense output: zero-pad the final linear to a multiple of 128 lanes,
    # slice back outside the kernel (unmasked vst inside the kernel).
    n_pad = max(128, pl.cdiv(n_outputs, 128) * 128)
    w_c2 = jnp.zeros((M, n_pad), jnp.float32).at[:, :n_outputs].set(params["w_c2"])
    b_c2 = jnp.zeros((1, n_pad), jnp.float32).at[:, :n_outputs].set(params["b_c2"])

    tb = _pick_batch_tile(B)
    grid = (B // tb,)

    def row_spec(last):
        return pl.BlockSpec((tb, last), lambda b: (b, 0))

    def const_spec(r, c):
        # Same block index every grid step -> stays VMEM-resident (no re-DMA).
        return pl.BlockSpec((r, c), lambda b: (0, 0))

    weights = (
        params["g_pre"], params["be_pre"], params["w_pre"], params["b_pre"],
        params["g_cls"], params["be_cls"], params["w_c1"], params["b_c1"],
        w_c2, b_c2,
    )
    in_specs = [row_spec(D), row_spec(D)] + [const_spec(*w.shape) for w in weights]

    # Explicit VMEM budget: resident weights + double-buffered activation tiles
    # + scratch, with 2x headroom.  Safe across v5e / v6e / v7x.
    w_bytes = sum(int(w.size) * 4 for w in weights)
    act_bytes = (2 * tb * D + tb * n_pad) * 4 * 2          # inputs+output, 2 buffers
    scratch_bytes = tb * in_pre * 4
    vmem_bytes = int(2 * (w_bytes + act_bytes + scratch_bytes)) + (2 << 20)
    vmem_bytes = min(48 << 20, max(16 << 20, vmem_bytes))

    out = pl.pallas_call(
        _weighted_head_kernel,
        out_shape=jax.ShapeDtypeStruct((B, n_pad), jnp.float32),
        grid_spec=pltpu.PrefetchScalarGridSpec(
            num_scalar_prefetch=0,
            grid=grid,
            in_specs=in_specs,
            out_specs=pl.BlockSpec((tb, n_pad), lambda b: (b, 0)),
            scratch_shapes=[pltpu.VMEM((tb, in_pre), jnp.float32)],
        ),
        compiler_params=pltpu.CompilerParams(
            dimension_semantics=("parallel",),     # v7x: shard batch across 2 TCs
            vmem_limit_bytes=vmem_bytes,
        ),
    )(img, txt, *weights)

    return out[:, :n_outputs]


# ---------------------------------------------------------------------------
# Deterministic parameter construction (synthetic, PyTorch-shaped)
# ---------------------------------------------------------------------------
def make_params(key, hidden_dim, middle_dim, n_outputs):
    # hidden_dim is the FFLayer/LayerNorm input dim (= 4 * per-modality dim).
    ks = jax.random.split(key, 7)

    def lin(k, fan_in, fan_out, scale=0.02):
        kw, kb = jax.random.split(k)
        w = scale * jax.random.normal(kw, (fan_in, fan_out), jnp.float32)  # (in, out)
        b = scale * jax.random.normal(kb, (1, fan_out), jnp.float32)
        return w, b

    w_pre, b_pre = lin(ks[0], hidden_dim, middle_dim)     # preprocess Linear
    w_c1, b_c1 = lin(ks[1], middle_dim, middle_dim)       # classifier Linear 1
    w_c2, b_c2 = lin(ks[2], middle_dim, n_outputs)        # classifier Linear 2
    g_pre = 1.0 + 0.01 * jax.random.normal(ks[3], (1, hidden_dim), jnp.float32)
    be_pre = 0.01 * jax.random.normal(ks[4], (1, hidden_dim), jnp.float32)
    g_cls = 1.0 + 0.01 * jax.random.normal(ks[5], (1, middle_dim), jnp.float32)
    be_cls = 0.01 * jax.random.normal(ks[6], (1, middle_dim), jnp.float32)
    # NOTE: WeightedHead.attention is defined but unused in forward(); omitted.
    return dict(w_pre=w_pre, b_pre=b_pre, g_pre=g_pre, be_pre=be_pre,
                w_c1=w_c1, b_c1=b_c1, g_cls=g_cls, be_cls=be_cls,
                w_c2=w_c2, b_c2=b_c2)


# ---------------------------------------------------------------------------
# Pure-JAX reference (correctness check)
# ---------------------------------------------------------------------------
def reference_forward(img, txt, p):
    def ln(x, g, b):
        mu = jnp.mean(x, -1, keepdims=True)
        var = jnp.mean((x - mu) ** 2, -1, keepdims=True)
        return (x - mu) / jnp.sqrt(var + 1e-5) * g + b

    def gelu(x):
        return 0.5 * x * (1.0 + jax.lax.erf(x / jnp.sqrt(2.0)))

    x = jnp.concatenate([img, txt, jnp.abs(txt - img), txt * img], axis=-1)
    rep = gelu(ln(x, p["g_pre"], p["be_pre"]) @ p["w_pre"] + p["b_pre"])
    h = gelu(ln(rep, p["g_cls"], p["be_cls"]) @ p["w_c1"] + p["b_c1"])
    return h @ p["w_c2"] + p["b_c2"]


# ---------------------------------------------------------------------------
if __name__ == "__main__":
    B = 8
    feat_dim = 32                       # per-modality feature dim
    hidden_dim = 4 * feat_dim           # = 128 (FFLayer in_dim, lane-dense)
    middle_dim = 128
    n_outputs = 8

    key = jax.random.PRNGKey(0)
    k_img, k_txt, k_par = jax.random.split(key, 3)
    img = jax.random.normal(k_img, (B, feat_dim), jnp.float32)
    txt = jax.random.normal(k_txt, (B, feat_dim), jnp.float32)
    params = make_params(k_par, hidden_dim, middle_dim, n_outputs)

    out = jax.block_until_ready(weighted_head_forward(img, txt, params))
    ref = reference_forward(img, txt, params)

    assert out.shape == (B, n_outputs)
    assert jnp.allclose(out, ref, atol=1e-4, rtol=1e-4), "mismatch vs reference"

    print("KERNEL_OK")
</pallas_src>

<mosaic_0001>
module attributes {stable_mosaic.version = 11 : i64} {
  func.func @_weighted_head_kernel(%arg0: i32, %arg1: memref<8x32xf32, #tpu.memory_space<vmem>>, %arg2: memref<8x32xf32, #tpu.memory_space<vmem>>, %arg3: memref<1x128xf32, #tpu.memory_space<vmem>>, %arg4: memref<1x128xf32, #tpu.memory_space<vmem>>, %arg5: memref<128x128xf32, #tpu.memory_space<vmem>>, %arg6: memref<1x128xf32, #tpu.memory_space<vmem>>, %arg7: memref<1x128xf32, #tpu.memory_space<vmem>>, %arg8: memref<1x128xf32, #tpu.memory_space<vmem>>, %arg9: memref<128x128xf32, #tpu.memory_space<vmem>>, %arg10: memref<1x128xf32, #tpu.memory_space<vmem>>, %arg11: memref<128x128xf32, #tpu.memory_space<vmem>>, %arg12: memref<1x128xf32, #tpu.memory_space<vmem>>, %arg13: memref<8x128xf32, #tpu.memory_space<vmem>>, %arg14: memref<8x128xf32, #tpu.memory_space<vmem>>) attributes {dimension_semantics = [#tpu.dimension_semantics<parallel>], iteration_bounds = array<i64: 1>, scalar_prefetch = 0 : i64, scratch_operands = 1 : i64, tpu.core_type = #tpu.core_type<tc>, window_params = [{transform_indices = @transform_0, window_bounds = array<i64: 8, 32>}, {transform_indices = @transform_1, window_bounds = array<i64: 8, 32>}, {pipeline_mode = #tpu.pipeline_mode<synchronous>, transform_indices = @transform_2, window_bounds = array<i64: 1, 128>}, {pipeline_mode = #tpu.pipeline_mode<synchronous>, transform_indices = @transform_3, window_bounds = array<i64: 1, 128>}, {pipeline_mode = #tpu.pipeline_mode<synchronous>, transform_indices = @transform_4, window_bounds = array<i64: 128, 128>}, {pipeline_mode = #tpu.pipeline_mode<synchronous>, transform_indices = @transform_5, window_bounds = array<i64: 1, 128>}, {pipeline_mode = #tpu.pipeline_mode<synchronous>, transform_indices = @transform_6, window_bounds = array<i64: 1, 128>}, {pipeline_mode = #tpu.pipeline_mode<synchronous>, transform_indices = @transform_7, window_bounds = array<i64: 1, 128>}, {pipeline_mode = #tpu.pipeline_mode<synchronous>, transform_indices = @transform_8, window_bounds = array<i64: 128, 128>}, {pipeline_mode = #tpu.pipeline_mode<synchronous>, transform_indices = @transform_9, window_bounds = array<i64: 1, 128>}, {pipeline_mode = #tpu.pipeline_mode<synchronous>, transform_indices = @transform_10, window_bounds = array<i64: 128, 128>}, {pipeline_mode = #tpu.pipeline_mode<synchronous>, transform_indices = @transform_11, window_bounds = array<i64: 1, 128>}, {transform_indices = @transform_12, window_bounds = array<i64: 8, 128>}]} {
    %c0 = arith.constant 0 : index
    %c0_0 = arith.constant 0 : index
    %0 = vector.load %arg1[%c0, %c0_0] : memref<8x32xf32, #tpu.memory_space<vmem>>, vector<8x32xf32>
    %c0_1 = arith.constant 0 : index
    %c0_2 = arith.constant 0 : index
    %1 = vector.load %arg2[%c0_1, %c0_2] : memref<8x32xf32, #tpu.memory_space<vmem>>, vector<8x32xf32>
    %c0_3 = arith.constant 0 : index
    %c0_4 = arith.constant 0 : index
    %2 = vector.load %arg14[%c0_3, %c0_4] : memref<8x128xf32, #tpu.memory_space<vmem>>, vector<8x32xf32>
    tpu.vector_store %arg14[%c0_3, %c0_4], %0 {strides = array<i32>} : memref<8x128xf32, #tpu.memory_space<vmem>>, vector<8x32xf32>,
    %c0_5 = arith.constant 0 : index
    %c32 = arith.constant 32 : index
    %3 = vector.load %arg14[%c0_5, %c32] : memref<8x128xf32, #tpu.memory_space<vmem>>, vector<8x32xf32>
    tpu.vector_store %arg14[%c0_5, %c32], %1 {strides = array<i32>} : memref<8x128xf32, #tpu.memory_space<vmem>>, vector<8x32xf32>,
    %4 = arith.subf %1, %0 : vector<8x32xf32>
    %5 = math.absf %4 : vector<8x32xf32>
    %c0_6 = arith.constant 0 : index
    %c64 = arith.constant 64 : index
    %6 = vector.load %arg14[%c0_6, %c64] : memref<8x128xf32, #tpu.memory_space<vmem>>, vector<8x32xf32>
    tpu.vector_store %arg14[%c0_6, %c64], %5 {strides = array<i32>} : memref<8x128xf32, #tpu.memory_space<vmem>>, vector<8x32xf32>,
    %7 = arith.mulf %1, %0 : vector<8x32xf32>
    %c0_7 = arith.constant 0 : index
    %c96 = arith.constant 96 : index
    %8 = vector.load %arg14[%c0_7, %c96] : memref<8x128xf32, #tpu.memory_space<vmem>>, vector<8x32xf32>
    tpu.vector_store %arg14[%c0_7, %c96], %7 {strides = array<i32>} : memref<8x128xf32, #tpu.memory_space<vmem>>, vector<8x32xf32>,
    %c0_8 = arith.constant 0 : index
    %c0_9 = arith.constant 0 : index
    %9 = vector.load %arg14[%c0_8, %c0_9] : memref<8x128xf32, #tpu.memory_space<vmem>>, vector<8x128xf32>
    %c0_10 = arith.constant 0 : index
    %c0_11 = arith.constant 0 : index
    %10 = vector.load %arg3[%c0_10, %c0_11] : memref<1x128xf32, #tpu.memory_space<vmem>>, vector<1x128xf32>
    %c0_12 = arith.constant 0 : index
    %c0_13 = arith.constant 0 : index
    %11 = vector.load %arg4[%c0_12, %c0_13] : memref<1x128xf32, #tpu.memory_space<vmem>>, vector<1x128xf32>
    %cst = arith.constant dense<0.000000e+00> : vector<8xf32>
    %12 = vector.multi_reduction <add>, %9, %cst [1] : vector<8x128xf32> to vector<8xf32>
    %13 = vector.shape_cast %12 : vector<8xf32> to vector<8x1xf32>
    %cst_14 = arith.constant 1.280000e+02 : f32
    %14 = vector.broadcast %cst_14 : f32 to vector<8x1xf32>
    %15 = arith.divf %13, %14 : vector<8x1xf32>
    %16 = vector.broadcast %15 : vector<8x1xf32> to vector<8x128xf32>
    %17 = arith.subf %9, %16 : vector<8x128xf32>
    %18 = arith.mulf %17, %17 : vector<8x128xf32>
    %cst_15 = arith.constant dense<0.000000e+00> : vector<8xf32>
    %19 = vector.multi_reduction <add>, %18, %cst_15 [1] : vector<8x128xf32> to vector<8xf32>
    %20 = vector.shape_cast %19 : vector<8xf32> to vector<8x1xf32>
    %cst_16 = arith.constant 1.280000e+02 : f32
    %21 = vector.broadcast %cst_16 : f32 to vector<8x1xf32>
    %22 = arith.divf %20, %21 : vector<8x1xf32>
    %cst_17 = arith.constant 9.99999974E-6 : f32
    %23 = vector.broadcast %cst_17 : f32 to vector<8x1xf32>
    %24 = arith.addf %22, %23 : vector<8x1xf32>
    %25 = math.rsqrt %24 : vector<8x1xf32>
    %26 = vector.broadcast %25 : vector<8x1xf32> to vector<8x128xf32>
    %27 = arith.mulf %17, %26 : vector<8x128xf32>
    %28 = vector.broadcast %10 : vector<1x128xf32> to vector<8x128xf32>
    %29 = arith.mulf %27, %28 : vector<8x128xf32>
    %30 = vector.broadcast %11 : vector<1x128xf32> to vector<8x128xf32>
    %31 = arith.addf %29, %30 : vector<8x128xf32>
    %c0_18 = arith.constant 0 : index
    %c0_19 = arith.constant 0 : index
    %32 = vector.load %arg5[%c0_18, %c0_19] : memref<128x128xf32, #tpu.memory_space<vmem>>, vector<128x128xf32>
    %cst_20 = arith.constant dense<0.000000e+00> : vector<8x128xf32>
    %33 = tpu.matmul %31, %32, %cst_20 {dimension_numbers = #tpu.dot_dimension_numbers<[1], [0], [0], [1], [0, 0, 1, 1], [], []>} : vector<8x128xf32>, vector<128x128xf32>, vector<8x128xf32> -> vector<8x128xf32>
    %c0_21 = arith.constant 0 : index
    %c0_22 = arith.constant 0 : index
    %34 = vector.load %arg6[%c0_21, %c0_22] : memref<1x128xf32, #tpu.memory_space<vmem>>, vector<1x128xf32>
    %35 = vector.broadcast %34 : vector<1x128xf32> to vector<8x128xf32>
    %36 = arith.addf %33, %35 : vector<8x128xf32>
    %cst_23 = arith.constant 5.000000e-01 : f32
    %37 = vector.broadcast %cst_23 : f32 to vector<8x128xf32>
    %38 = arith.mulf %37, %36 : vector<8x128xf32>
    %cst_24 = arith.constant 0.707106769 : f32
    %39 = vector.broadcast %cst_24 : f32 to vector<8x128xf32>
    %40 = arith.mulf %36, %39 : vector<8x128xf32>
    %41 = math.erf %40 : vector<8x128xf32>
    %cst_25 = arith.constant 1.000000e+00 : f32
    %42 = vector.broadcast %cst_25 : f32 to vector<8x128xf32>
    %43 = arith.addf %42, %41 : vector<8x128xf32>
    %44 = arith.mulf %38, %43 : vector<8x128xf32>
    %c0_26 = arith.constant 0 : index
    %c0_27 = arith.constant 0 : index
    %45 = vector.load %arg7[%c0_26, %c0_27] : memref<1x128xf32, #tpu.memory_space<vmem>>, vector<1x128xf32>
    %c0_28 = arith.constant 0 : index
    %c0_29 = arith.constant 0 : index
    %46 = vector.load %arg8[%c0_28, %c0_29] : memref<1x128xf32, #tpu.memory_space<vmem>>, vector<1x128xf32>
    %cst_30 = arith.constant dense<0.000000e+00> : vector<8xf32>
    %47 = vector.multi_reduction <add>, %44, %cst_30 [1] : vector<8x128xf32> to vector<8xf32>
    %48 = vector.shape_cast %47 : vector<8xf32> to vector<8x1xf32>
    %cst_31 = arith.constant 1.280000e+02 : f32
    %49 = vector.broadcast %cst_31 : f32 to vector<8x1xf32>
    %50 = arith.divf %48, %49 : vector<8x1xf32>
    %51 = vector.broadcast %50 : vector<8x1xf32> to vector<8x128xf32>
    %52 = arith.subf %44, %51 : vector<8x128xf32>
    %53 = arith.mulf %52, %52 : vector<8x128xf32>
    %cst_32 = arith.constant dense<0.000000e+00> : vector<8xf32>
    %54 = vector.multi_reduction <add>, %53, %cst_32 [1] : vector<8x128xf32> to vector<8xf32>
    %55 = vector.shape_cast %54 : vector<8xf32> to vector<8x1xf32>
    %cst_33 = arith.constant 1.280000e+02 : f32
    %56 = vector.broadcast %cst_33 : f32 to vector<8x1xf32>
    %57 = arith.divf %55, %56 : vector<8x1xf32>
    %cst_34 = arith.constant 9.99999974E-6 : f32
    %58 = vector.broadcast %cst_34 : f32 to vector<8x1xf32>
    %59 = arith.addf %57, %58 : vector<8x1xf32>
    %60 = math.rsqrt %59 : vector<8x1xf32>
    %61 = vector.broadcast %60 : vector<8x1xf32> to vector<8x128xf32>
    %62 = arith.mulf %52, %61 : vector<8x128xf32>
    %63 = vector.broadcast %45 : vector<1x128xf32> to vector<8x128xf32>
    %64 = arith.mulf %62, %63 : vector<8x128xf32>
    %65 = vector.broadcast %46 : vector<1x128xf32> to vector<8x128xf32>
    %66 = arith.addf %64, %65 : vector<8x128xf32>
    %c0_35 = arith.constant 0 : index
    %c0_36 = arith.constant 0 : index
    %67 = vector.load %arg9[%c0_35, %c0_36] : memref<128x128xf32, #tpu.memory_space<vmem>>, vector<128x128xf32>
    %cst_37 = arith.constant dense<0.000000e+00> : vector<8x128xf32>
    %68 = tpu.matmul %66, %67, %cst_37 {dimension_numbers = #tpu.dot_dimension_numbers<[1], [0], [0], [1], [0, 0, 1, 1], [], []>} : vector<8x128xf32>, vector<128x128xf32>, vector<8x128xf32> -> vector<8x128xf32>
    %c0_38 = arith.constant 0 : index
    %c0_39 = arith.constant 0 : index
    %69 = vector.load %arg10[%c0_38, %c0_39] : memref<1x128xf32, #tpu.memory_space<vmem>>, vector<1x128xf32>
    %70 = vector.broadcast %69 : vector<1x128xf32> to vector<8x128xf32>
    %71 = arith.addf %68, %70 : vector<8x128xf32>
    %cst_40 = arith.constant 5.000000e-01 : f32
    %72 = vector.broadcast %cst_40 : f32 to vector<8x128xf32>
    %73 = arith.mulf %72, %71 : vector<8x128xf32>
    %cst_41 = arith.constant 0.707106769 : f32
    %74 = vector.broadcast %cst_41 : f32 to vector<8x128xf32>
    %75 = arith.mulf %71, %74 : vector<8x128xf32>
    %76 = math.erf %75 : vector<8x128xf32>
    %cst_42 = arith.constant 1.000000e+00 : f32
    %77 = vector.broadcast %cst_42 : f32 to vector<8x128xf32>
    %78 = arith.addf %77, %76 : vector<8x128xf32>
    %79 = arith.mulf %73, %78 : vector<8x128xf32>
    %c0_43 = arith.constant 0 : index
    %c0_44 = arith.constant 0 : index
    %80 = vector.load %arg11[%c0_43, %c0_44] : memref<128x128xf32, #tpu.memory_space<vmem>>, vector<128x128xf32>
    %cst_45 = arith.constant dense<0.000000e+00> : vector<8x128xf32>
    %81 = tpu.matmul %79, %80, %cst_45 {dimension_numbers = #tpu.dot_dimension_numbers<[1], [0], [0], [1], [0, 0, 1, 1], [], []>} : vector<8x128xf32>, vector<128x128xf32>, vector<8x128xf32> -> vector<8x128xf32>
    %c0_46 = arith.constant 0 : index
    %c0_47 = arith.constant 0 : index
    %82 = vector.load %arg12[%c0_46, %c0_47] : memref<1x128xf32, #tpu.memory_space<vmem>>, vector<1x128xf32>
    %83 = vector.broadcast %82 : vector<1x128xf32> to vector<8x128xf32>
    %84 = arith.addf %81, %83 : vector<8x128xf32>
    %c0_48 = arith.constant 0 : index
    %c0_49 = arith.constant 0 : index
    %85 = vector.load %arg13[%c0_48, %c0_49] : memref<8x128xf32, #tpu.memory_space<vmem>>, vector<8x128xf32>
    tpu.vector_store %arg13[%c0_48, %c0_49], %84 {strides = array<i32>} : memref<8x128xf32, #tpu.memory_space<vmem>>, vector<8x128xf32>,
    return
  }
  func.func @transform_0(%arg0: i32) -> (i32, i32) {
    %c0_i32 = arith.constant 0 : i32
    %c0_i32_0 = arith.constant 0 : i32
    return %arg0, %c0_i32 : i32, i32
  }
  func.func @transform_1(%arg0: i32) -> (i32, i32) {
    %c0_i32 = arith.constant 0 : i32
    %c0_i32_0 = arith.constant 0 : i32
    return %arg0, %c0_i32 : i32, i32
  }
  func.func @transform_2(%arg0: i32) -> (i32, i32) {
    %c0_i32 = arith.constant 0 : i32
    %c0_i32_0 = arith.constant 0 : i32
    %c0_i32_1 = arith.constant 0 : i32
    return %c0_i32, %c0_i32_0 : i32, i32
  }
  func.func @transform_3(%arg0: i32) -> (i32, i32) {
    %c0_i32 = arith.constant 0 : i32
    %c0_i32_0 = arith.constant 0 : i32
    %c0_i32_1 = arith.constant 0 : i32
    return %c0_i32, %c0_i32_0 : i32, i32
  }
  func.func @transform_4(%arg0: i32) -> (i32, i32) {
    %c0_i32 = arith.constant 0 : i32
    %c0_i32_0 = arith.constant 0 : i32
    %c0_i32_1 = arith.constant 0 : i32
    return %c0_i32, %c0_i32_0 : i32, i32
  }
  func.func @transform_5(%arg0: i32) -> (i32, i32) {
    %c0_i32 = arith.constant 0 : i32
    %c0_i32_0 = arith.constant 0 : i32
    %c0_i32_1 = arith.constant 0 : i32
    return %c0_i32, %c0_i32_0 : i32, i32
  }
  func.func @transform_6(%arg0: i32) -> (i32, i32) {
    %c0_i32 = arith.constant 0 : i32
    %c0_i32_0 = arith.constant 0 : i32
    %c0_i32_1 = arith.constant 0 : i32
    return %c0_i32, %c0_i32_0 : i32, i32
  }
  func.func @transform_7(%arg0: i32) -> (i32, i32) {
    %c0_i32 = arith.constant 0 : i32
    %c0_i32_0 = arith.constant 0 : i32
    %c0_i32_1 = arith.constant 0 : i32
    return %c0_i32, %c0_i32_0 : i32, i32
  }
  func.func @transform_8(%arg0: i32) -> (i32, i32) {
    %c0_i32 = arith.constant 0 : i32
    %c0_i32_0 = arith.constant 0 : i32
    %c0_i32_1 = arith.constant 0 : i32
    return %c0_i32, %c0_i32_0 : i32, i32
  }
  func.func @transform_9(%arg0: i32) -> (i32, i32) {
    %c0_i32 = arith.constant 0 : i32
    %c0_i32_0 = arith.constant 0 : i32
    %c0_i32_1 = arith.constant 0 : i32
    return %c0_i32, %c0_i32_0 : i32, i32
  }
  func.func @transform_10(%arg0: i32) -> (i32, i32) {
    %c0_i32 = arith.constant 0 : i32
    %c0_i32_0 = arith.constant 0 : i32
    %c0_i32_1 = arith.constant 0 : i32
    return %c0_i32, %c0_i32_0 : i32, i32
  }
  func.func @transform_11(%arg0: i32) -> (i32, i32) {
    %c0_i32 = arith.constant 0 : i32
    %c0_i32_0 = arith.constant 0 : i32
    %c0_i32_1 = arith.constant 0 : i32
    return %c0_i32, %c0_i32_0 : i32, i32
  }
  func.func @transform_12(%arg0: i32) -> (i32, i32) {
    %c0_i32 = arith.constant 0 : i32
    %c0_i32_0 = arith.constant 0 : i32
    return %arg0, %c0_i32 : i32, i32
  }
}

</mosaic_0001>

<llo_original>
// kernel: tpu_custom_call.1
$region0: #{tpu_custom_call.1}
  #allocation0 [shape = 'u32[]', space=smem, size = 0x4, offset = 0x4, fixed_abs, tag = 'smem constant byte address 0x4 - core index']
  #allocation1 [shape = 'u32[144,128]{1,0:T(1,128)}', space=vmem, size = 0x12000, scoped, tag = 'internal scratch']
  #allocation2 [shape = 'f32[8,128]{1,0:T(8,128)}', space=vmem, size = 0x1000, scoped, tag = 'scratch operand']
  %s0 = inlined_call_operand.hbm [shape: f32[8,32], index: 0, kind: input, shape index: {}]
  %s1 = inlined_call_operand.hbm [shape: f32[8,32], index: 1, kind: input, shape index: {}]
  %s2 = inlined_call_operand.vmem [shape: f32[1,128], index: 2, kind: input, shape index: {}]
  %s3 = inlined_call_operand.vmem [shape: f32[1,128], index: 3, kind: input, shape index: {}]
  %s4 = inlined_call_operand.hbm [shape: f32[128,128], index: 4, kind: input, shape index: {}]
  %s5 = inlined_call_operand.vmem [shape: f32[1,128], index: 5, kind: input, shape index: {}]
  %s6 = inlined_call_operand.vmem [shape: f32[1,128], index: 6, kind: input, shape index: {}]
  %s7 = inlined_call_operand.vmem [shape: f32[1,128], index: 7, kind: input, shape index: {}]
  %s8 = inlined_call_operand.hbm [shape: f32[128,128], index: 8, kind: input, shape index: {}]
  %s9 = inlined_call_operand.vmem [shape: f32[1,128], index: 9, kind: input, shape index: {}]
  %s10 = inlined_call_operand.hbm [shape: f32[128,128], index: 10, kind: input, shape index: {}]
  %s11 = inlined_call_operand.vmem [shape: f32[1,128], index: 11, kind: input, shape index: {}]
  %s12 = inlined_call_operand.hbm [shape: f32[8,128], index: 12, kind: output, shape index: {}]
  %s13 = sld [smem:[#allocation0]]
  $region78: #{tpu_custom_call.1} parent=0
    _
  %s15 = ssub.s32 1, %s13
  %s16 = scalar_select 0, %s15, %s13
  $region1: #{tpu_custom_call.1} parent=0
    #allocation3 [shape = 'u8[4096]{0}', space=vmem, size = 0x1000, scoped, tag = 'input window, operand 0, single buffered']
    #allocation4 [shape = 's32[1]{0}', space=sflag, size = 0x4, scoped, tag = 'scoped memory for tpu_custom_call.1']
    #allocation5 [shape = 's32[1]{0}', space=sflag, size = 0x4, scoped, tag = 'scoped memory for tpu_custom_call.1']
    #allocation6 [shape = 'u8[4096]{0}', space=vmem, size = 0x1000, scoped, tag = 'input window, operand 1, single buffered']
    #allocation7 [shape = 's32[1]{0}', space=sflag, size = 0x4, scoped, tag = 'scoped memory for tpu_custom_call.1']
    #allocation8 [shape = 'u8[65536]{0}', space=vmem, size = 0x10000, scoped, tag = 'input window, operand 4, single buffered']
    #allocation9 [shape = 'u8[65536]{0}', space=vmem, size = 0x10000, scoped, tag = 'input window, operand 8, single buffered']
    #allocation10 [shape = 's32[1]{0}', space=sflag, size = 0x4, scoped, tag = 'scoped memory for tpu_custom_call.1']
    #allocation11 [shape = 'u8[65536]{0}', space=vmem, size = 0x10000, scoped, tag = 'input window, operand 10, single buffered']
    #allocation12 [shape = 'u8[4096]{0}', space=vmem, size = 0x1000, scoped, tag = 'output window, operand 0, single buffered']
    %17 = vsyncpa [#allocation4], 0
    %18 = vsyncpa [#allocation7], 0
    %19 = vsyncpa [#allocation10], 0
    %20 = vsyncpa [#allocation5], 0
    // Predicated region
    $region2: #{tpu_custom_call.1} parent=1 // pred_check
      _
    $region3: #{tpu_custom_call.1} parent=1 // pred_check_branch
      %22 = sbr.rel (0) target = $region5
    $region4: #{tpu_custom_call.1} parent=1 // pred_region
      %s24 = ssub.s32 128, 128
      %25 = vsyncadd [#allocation4], %s24
      %s27 = sshll.u32 [#allocation3], 4
      %s28 = int_to_ptr.vmem [resolvable:$true] %s27
      %30 = dma.hbm_to_vmem [thread:$0]  %s0, 128, %s28, [#allocation4]
    $region5: #{tpu_custom_call.1} parent=1 // pred_fallthru
      _
    // Predicated region
    $region6: #{tpu_custom_call.1} parent=1 // pred_check
      _
    $region7: #{tpu_custom_call.1} parent=1 // pred_check_branch
      %32 = sbr.rel (0) target = $region9
    $region8: #{tpu_custom_call.1} parent=1 // pred_region
      %s34 = ssub.s32 128, 128
      %35 = vsyncadd [#allocation7], %s34
      %s37 = sshll.u32 [#allocation6], 4
      %s38 = int_to_ptr.vmem [resolvable:$true] %s37
      %40 = dma.hbm_to_vmem [thread:$0]  %s1, 128, %s38, [#allocation7]
    $region9: #{tpu_custom_call.1} parent=1 // pred_fallthru
      _
    // Predicated region
    $region10: #{tpu_custom_call.1} parent=1 // pred_check
      _
    $region11: #{tpu_custom_call.1} parent=1 // pred_check_branch
      %42 = sbr.rel (0) target = $region13
    $region12: #{tpu_custom_call.1} parent=1 // pred_region
      _
    $region13: #{tpu_custom_call.1} parent=1 // pred_fallthru
      _
    // Predicated region
    $region14: #{tpu_custom_call.1} parent=1 // pred_check
      _
    $region15: #{tpu_custom_call.1} parent=1 // pred_check_branch
      %44 = sbr.rel (0) target = $region17
    $region16: #{tpu_custom_call.1} parent=1 // pred_region
      _
    $region17: #{tpu_custom_call.1} parent=1 // pred_fallthru
      _
    // Predicated region
    $region18: #{tpu_custom_call.1} parent=1 // pred_check
      _
    $region19: #{tpu_custom_call.1} parent=1 // pred_check_branch
      %46 = sbr.rel (0) target = $region21
    $region20: #{tpu_custom_call.1} parent=1 // pred_region
      %s48 = ssub.s32 2048, 2048
      %49 = vsyncadd [#allocation7], %s48
      %s50 = sshll.u32 [#allocation8], 4
      %s51 = int_to_ptr.vmem [resolvable:$true] %s50
      %56 = dma.hbm_to_vmem [thread:$0]  %s4, 2048, %s51, [#allocation7], 128, 128, 8
    $region21: #{tpu_custom_call.1} parent=1 // pred_fallthru
      _
    // Predicated region
    $region22: #{tpu_custom_call.1} parent=1 // pred_check
      _
    $region23: #{tpu_custom_call.1} parent=1 // pred_check_branch
      %58 = sbr.rel (0) target = $region25
    $region24: #{tpu_custom_call.1} parent=1 // pred_region
      _
    $region25: #{tpu_custom_call.1} parent=1 // pred_fallthru
      _
    // Predicated region
    $region26: #{tpu_custom_call.1} parent=1 // pred_check
      _
    $region27: #{tpu_custom_call.1} parent=1 // pred_check_branch
      %60 = sbr.rel (0) target = $region29
    $region28: #{tpu_custom_call.1} parent=1 // pred_region
      _
    $region29: #{tpu_custom_call.1} parent=1 // pred_fallthru
      _
    // Predicated region
    $region30: #{tpu_custom_call.1} parent=1 // pred_check
      _
    $region31: #{tpu_custom_call.1} parent=1 // pred_check_branch
      %62 = sbr.rel (0) target = $region33
    $region32: #{tpu_custom_call.1} parent=1 // pred_region
      _
    $region33: #{tpu_custom_call.1} parent=1 // pred_fallthru
      _
    // Predicated region
    $region34: #{tpu_custom_call.1} parent=1 // pred_check
      _
    $region35: #{tpu_custom_call.1} parent=1 // pred_check_branch
      %64 = sbr.rel (0) target = $region37
    $region36: #{tpu_custom_call.1} parent=1 // pred_region
      %s66 = ssub.s32 2048, 2048
      %67 = vsyncadd [#allocation10], %s66
      %s68 = sshll.u32 [#allocation9], 4
      %s69 = int_to_ptr.vmem [resolvable:$true] %s68
      %74 = dma.hbm_to_vmem [thread:$0]  %s8, 2048, %s69, [#allocation10], 128, 128, 8
    $region37: #{tpu_custom_call.1} parent=1 // pred_fallthru
      _
    // Predicated region
    $region38: #{tpu_custom_call.1} parent=1 // pred_check
      _
    $region39: #{tpu_custom_call.1} parent=1 // pred_check_branch
      %76 = sbr.rel (0) target = $region41
    $region40: #{tpu_custom_call.1} parent=1 // pred_region
      _
    $region41: #{tpu_custom_call.1} parent=1 // pred_fallthru
      _
    // Predicated region
    $region42: #{tpu_custom_call.1} parent=1 // pred_check
      _
    $region43: #{tpu_custom_call.1} parent=1 // pred_check_branch
      %78 = sbr.rel (0) target = $region45
    $region44: #{tpu_custom_call.1} parent=1 // pred_region
      %s80 = ssub.s32 2048, 2048
      %81 = vsyncadd [#allocation10], %s80
      %s82 = sshll.u32 [#allocation11], 4
      %s83 = int_to_ptr.vmem [resolvable:$true] %s82
      %88 = dma.hbm_to_vmem [thread:$0]  %s10, 2048, %s83, [#allocation10], 128, 128, 8
    $region45: #{tpu_custom_call.1} parent=1 // pred_fallthru
      _
    // Predicated region
    $region46: #{tpu_custom_call.1} parent=1 // pred_check
      _
    $region47: #{tpu_custom_call.1} parent=1 // pred_check_branch
      %90 = sbr.rel (0) target = $region49
    $region48: #{tpu_custom_call.1} parent=1 // pred_region
      _
    $region49: #{tpu_custom_call.1} parent=1 // pred_fallthru
      _
    // Predicated region
    $region50: #{tpu_custom_call.1} parent=1 // pred_check
      _
    $region51: #{tpu_custom_call.1} parent=1 // pred_check_branch
      %92 = sbr.rel (0) target = $region53
    $region52: #{tpu_custom_call.1} parent=1 // pred_region
      %93 = dma.done [#allocation4], 128
    $region53: #{tpu_custom_call.1} parent=1 // pred_fallthru
      _
    // Predicated region
    $region54: #{tpu_custom_call.1} parent=1 // pred_check
      _
    $region55: #{tpu_custom_call.1} parent=1 // pred_check_branch
      %95 = sbr.rel (0) target = $region57
    $region56: #{tpu_custom_call.1} parent=1 // pred_region
      %96 = dma.done [#allocation7], 128
    $region57: #{tpu_custom_call.1} parent=1 // pred_fallthru
      _
    // Predicated region
    $region58: #{tpu_custom_call.1} parent=1 // pred_check
      _
    $region59: #{tpu_custom_call.1} parent=1 // pred_check_branch
      %98 = sbr.rel (0) target = $region61
    $region60: #{tpu_custom_call.1} parent=1 // pred_region
      %99 = dma.done [#allocation7], 2048
    $region61: #{tpu_custom_call.1} parent=1 // pred_fallthru
      _
    // Predicated region
    $region62: #{tpu_custom_call.1} parent=1 // pred_check
      _
    $region63: #{tpu_custom_call.1} parent=1 // pred_check_branch
      %101 = sbr.rel (0) target = $region65
    $region64: #{tpu_custom_call.1} parent=1 // pred_region
      %102 = dma.done [#allocation10], 2048
    $region65: #{tpu_custom_call.1} parent=1 // pred_fallthru
      _
    // Predicated region
    $region66: #{tpu_custom_call.1} parent=1 // pred_check
      _
    $region67: #{tpu_custom_call.1} parent=1 // pred_check_branch
      %104 = sbr.rel (0) target = $region69
    $region68: #{tpu_custom_call.1} parent=1 // pred_region
      %105 = dma.done [#allocation10], 2048
    $region69: #{tpu_custom_call.1} parent=1 // pred_fallthru
      _
    %v106 = vld [vmem:[#allocation3] sm:$0xff]
    %v107 = vld [vmem:[#allocation6] sm:$0xff]
    %vm108 = vcmask 261120
    %109 = vst.msk [vmem:[#allocation2] sm:$0xff] %vm108, %v106
    %111 = vrot.lane.b32.xlu0 %v107, 32
    %v112 = vpop.permute.xlu0 %111
    %vm114 = vcmask 523520
    %115 = vst.msk [vmem:[#allocation2] sm:$0xff] %vm114, %v112
    %v116 = vsub.f32 %v107, %v106
    %v117 = vand.u32 2147483647, %v116
    %119 = vrot.lane.b32.xlu0 %v117, 64
    %v120 = vpop.permute.xlu0 %119
    %vm122 = vcmask 785920
    %123 = vst.msk [vmem:[#allocation2] sm:$0xff] %vm122, %v120
    %v124 = vmul.f32 %v107, %v106
    %126 = vrot.lane.b32.xlu0 %v124, 96
    %v127 = vpop.permute.xlu0 %126
    %vm129 = vcmask 1048320
    %130 = vst.msk [vmem:[#allocation2] sm:$0xff] %vm129, %v127
    %v131 = vld [vmem:[#allocation2] sm:$0xff]
    %v132 = vld [vmem:[%s2] sm:$0x1]
    %v133 = vld [vmem:[%s3] sm:$0x1]
    %134 = vadd.xlane.f32.xlu0 %v131
    %v135 = vpop.xlane.xlu0 %134
    %v136 = vrcp.pop 128.0
    %v137 = vmul.f32 %v135, %v136
    %v138 = vsub.f32 %v131, %v137
    %v139 = vmul.f32 %v138, %v138
    %140 = vadd.xlane.f32.xlu0 %v139
    %v141 = vpop.xlane.xlu0 %140
    %v142 = vmul.f32 %v141, %v136
    %v143 = vadd.f32 %v142, 1e-05
    %v144 = vrsqrt.pop %v143
    %v145 = vmul.f32 %v138, %v144
    %v147 = vlaneseq
    %v148 = vshrl.u32 %v147, 7
    %v149 = vsub.s32 0, %v148
    %v150 = vrot.slane %v132, %v149
    %v152 = vmul.f32 %v145, %v150
    %v154 = vlaneseq
    %v155 = vshrl.u32 %v154, 7
    %v156 = vsub.s32 0, %v155
    %v157 = vrot.slane %v133, %v156
    %v159 = vadd.f32 %v152, %v157
    %v160 = vld [vmem:[#allocation8] sm:$0xff]
    %v161 = vld [vmem:[#allocation8 + $0x8] sm:$0xff]
    %v162 = vld [vmem:[#allocation8 + $0x10] sm:$0xff]
    %v163 = vld [vmem:[#allocation8 + $0x18] sm:$0xff]
    %v164 = vld [vmem:[#allocation8 + $0x20] sm:$0xff]
    %v165 = vld [vmem:[#allocation8 + $0x28] sm:$0xff]
    %v166 = vld [vmem:[#allocation8 + $0x30] sm:$0xff]
    %v167 = vld [vmem:[#allocation8 + $0x38] sm:$0xff]
    %v168 = vld [vmem:[#allocation8 + $0x40] sm:$0xff]
    %v169 = vld [vmem:[#allocation8 + $0x48] sm:$0xff]
    %v170 = vld [vmem:[#allocation8 + $0x50] sm:$0xff]
    %v171 = vld [vmem:[#allocation8 + $0x58] sm:$0xff]
    %v172 = vld [vmem:[#allocation8 + $0x60] sm:$0xff]
    %v173 = vld [vmem:[#allocation8 + $0x68] sm:$0xff]
    %v174 = vld [vmem:[#allocation8 + $0x70] sm:$0xff]
    %v175 = vld [vmem:[#allocation8 + $0x78] sm:$0xff]
    %v176 = vld [vmem:[%s5] sm:$0x1]
    %v178 = vlaneseq
    %v179 = vshrl.u32 %v178, 7
    %v180 = vsub.s32 0, %v179
    %v181 = vrot.slane %v176, %v180
    %183 = vmatprep.subr.mxu0 0.0
    %184 = vmatpush1.msra.mxu0 %v160
    %185 = vmatprep.subr.mxu0 0.0
    %186 = vmatpush1.msra.mxu0 %v161
    %187 = vmatprep.subr.mxu0 0.0
    %188 = vmatpush1.msra.mxu0 %v162
    %189 = vmatprep.subr.mxu0 0.0
    %190 = vmatpush1.msra.mxu0 %v163
    %191 = vmatprep.subr.mxu0 0.0
    %192 = vmatpush1.msra.mxu0 %v164
    %193 = vmatprep.subr.mxu0 0.0
    %194 = vmatpush1.msra.mxu0 %v165
    %195 = vmatprep.subr.mxu0 0.0
    %196 = vmatpush1.msra.mxu0 %v166
    %197 = vmatprep.subr.mxu0 0.0
    %198 = vmatpush1.msra.mxu0 %v167
    %199 = vmatprep.subr.mxu0 0.0
    %200 = vmatpush1.msra.mxu0 %v168
    %201 = vmatprep.subr.mxu0 0.0
    %202 = vmatpush1.msra.mxu0 %v169
    %203 = vmatprep.subr.mxu0 0.0
    %204 = vmatpush1.msra.mxu0 %v170
    %205 = vmatprep.subr.mxu0 0.0
    %206 = vmatpush1.msra.mxu0 %v171
    %207 = vmatprep.subr.mxu0 0.0
    %208 = vmatpush1.msra.mxu0 %v172
    %209 = vmatprep.subr.mxu0 0.0
    %210 = vmatpush1.msra.mxu0 %v173
    %211 = vmatprep.subr.mxu0 0.0
    %212 = vmatpush1.msra.mxu0 %v174
    %213 = vmatprep.subr.mxu0 0.0
    %214 = vmatpush1.msra.mxu0 %v175
    %215 = vmatprep.subr.mxu0 0.0
    %216 = vmatpush1.msra.mxu0 0.0
    %217 = vmatprep.subr.mxu0 0.0
    %218 = vmatpush1.msra.mxu0 0.0
    %219 = vmatprep.subr.mxu0 0.0
    %220 = vmatpush1.msra.mxu0 0.0
    %221 = vmatprep.subr.mxu0 0.0
    %222 = vmatpush1.msra.mxu0 0.0
    %223 = vmatprep.subr.mxu0 0.0
    %224 = vmatpush1.msra.mxu0 0.0
    %225 = vmatprep.subr.mxu0 0.0
    %226 = vmatpush1.msra.mxu0 0.0
    %227 = vmatprep.subr.mxu0 0.0
    %228 = vmatpush1.msra.mxu0 0.0
    %229 = vmatprep.subr.mxu0 0.0
    %230 = vmatpush1.msra.mxu0 0.0
    %231 = vmatprep.subr.mxu0 0.0
    %232 = vmatpush1.msra.mxu0 0.0
    %233 = vmatprep.subr.mxu0 0.0
    %234 = vmatpush1.msra.mxu0 0.0
    %235 = vmatprep.subr.mxu0 0.0
    %236 = vmatpush1.msra.mxu0 0.0
    %237 = vmatprep.subr.mxu0 0.0
    %238 = vmatpush1.msra.mxu0 0.0
    %239 = vmatprep.subr.mxu0 0.0
    %240 = vmatpush1.msra.mxu0 0.0
    %241 = vmatprep.subr.mxu0 0.0
    %242 = vmatpush1.msra.mxu0 0.0
    %243 = vmatprep.subr.mxu0 0.0
    %244 = vmatpush1.msra.mxu0 0.0
    %245 = vmatprep.subr.mxu0 0.0
    %246 = vmatpush1.msra.mxu0 0.0
    %247 = vmatprep.mubr.f32.mxu0 0.0
    %248 = vmatmul.mubr.f32.gmra.mrb[0].mxu0 %v159
    %v249 = vpop.f32.mrb[0].mxu0
    %v250 = vadd.f32 %v181, %v249
    %v251 = vpop.f32.mrb[0].mxu0
    %252 = vdwg.mxu0
    %v253 = vmul.f32 %v250, 0.5
    %v254 = vmul.f32 %v250, 0.70710677
    %v255 = verf.f32.pop %v254
    %v256 = vadd.f32 %v255, 1.0
    %v257 = vmul.f32 %v253, %v256
    %v258 = vld [vmem:[%s6] sm:$0x1]
    %v259 = vld [vmem:[%s7] sm:$0x1]
    %260 = vadd.xlane.f32.xlu0 %v257
    %v261 = vpop.xlane.xlu0 %260
    %v262 = vmul.f32 %v261, %v136
    %v263 = vsub.f32 %v257, %v262
    %v264 = vmul.f32 %v263, %v263
    %265 = vadd.xlane.f32.xlu0 %v264
    %v266 = vpop.xlane.xlu0 %265
    %v267 = vmul.f32 %v266, %v136
    %v268 = vadd.f32 %v267, 1e-05
    %v269 = vrsqrt.pop %v268
    %v270 = vmul.f32 %v263, %v269
    %v272 = vlaneseq
    %v273 = vshrl.u32 %v272, 7
    %v274 = vsub.s32 0, %v273
    %v275 = vrot.slane %v258, %v274
    %v277 = vmul.f32 %v270, %v275
    %v279 = vlaneseq
    %v280 = vshrl.u32 %v279, 7
    %v281 = vsub.s32 0, %v280
    %v282 = vrot.slane %v259, %v281
    %v284 = vadd.f32 %v277, %v282
    %v285 = vld [vmem:[#allocation9] sm:$0xff]
    %v286 = vld [vmem:[#allocation9 + $0x8] sm:$0xff]
    %v287 = vld [vmem:[#allocation9 + $0x10] sm:$0xff]
    %v288 = vld [vmem:[#allocation9 + $0x18] sm:$0xff]
    %v289 = vld [vmem:[#allocation9 + $0x20] sm:$0xff]
    %v290 = vld [vmem:[#allocation9 + $0x28] sm:$0xff]
    %v291 = vld [vmem:[#allocation9 + $0x30] sm:$0xff]
    %v292 = vld [vmem:[#allocation9 + $0x38] sm:$0xff]
    %v293 = vld [vmem:[#allocation9 + $0x40] sm:$0xff]
    %v294 = vld [vmem:[#allocation9 + $0x48] sm:$0xff]
    %v295 = vld [vmem:[#allocation9 + $0x50] sm:$0xff]
    %v296 = vld [vmem:[#allocation9 + $0x58] sm:$0xff]
    %v297 = vld [vmem:[#allocation9 + $0x60] sm:$0xff]
    %v298 = vld [vmem:[#allocation9 + $0x68] sm:$0xff]
    %v299 = vld [vmem:[#allocation9 + $0x70] sm:$0xff]
    %v300 = vld [vmem:[#allocation9 + $0x78] sm:$0xff]
    %v301 = vld [vmem:[%s9] sm:$0x1]
    %v303 = vlaneseq
    %v304 = vshrl.u32 %v303, 7
    %v305 = vsub.s32 0, %v304
    %v306 = vrot.slane %v301, %v305
    %308 = vmatprep.subr.mxu0 0.0
    %309 = vmatpush1.msra.mxu0 %v285
    %310 = vmatprep.subr.mxu0 0.0
    %311 = vmatpush1.msra.mxu0 %v286
    %312 = vmatprep.subr.mxu0 0.0
    %313 = vmatpush1.msra.mxu0 %v287
    %314 = vmatprep.subr.mxu0 0.0
    %315 = vmatpush1.msra.mxu0 %v288
    %316 = vmatprep.subr.mxu0 0.0
    %317 = vmatpush1.msra.mxu0 %v289
    %318 = vmatprep.subr.mxu0 0.0
    %319 = vmatpush1.msra.mxu0 %v290
    %320 = vmatprep.subr.mxu0 0.0
    %321 = vmatpush1.msra.mxu0 %v291
    %322 = vmatprep.subr.mxu0 0.0
    %323 = vmatpush1.msra.mxu0 %v292
    %324 = vmatprep.subr.mxu0 0.0
    %325 = vmatpush1.msra.mxu0 %v293
    %326 = vmatprep.subr.mxu0 0.0
    %327 = vmatpush1.msra.mxu0 %v294
    %328 = vmatprep.subr.mxu0 0.0
    %329 = vmatpush1.msra.mxu0 %v295
    %330 = vmatprep.subr.mxu0 0.0
    %331 = vmatpush1.msra.mxu0 %v296
    %332 = vmatprep.subr.mxu0 0.0
    %333 = vmatpush1.msra.mxu0 %v297
    %334 = vmatprep.subr.mxu0 0.0
    %335 = vmatpush1.msra.mxu0 %v298
    %336 = vmatprep.subr.mxu0 0.0
    %337 = vmatpush1.msra.mxu0 %v299
    %338 = vmatprep.subr.mxu0 0.0
    %339 = vmatpush1.msra.mxu0 %v300
    %340 = vmatprep.subr.mxu0 0.0
    %341 = vmatpush1.msra.mxu0 0.0
    %342 = vmatprep.subr.mxu0 0.0
    %343 = vmatpush1.msra.mxu0 0.0
    %344 = vmatprep.subr.mxu0 0.0
    %345 = vmatpush1.msra.mxu0 0.0
    %346 = vmatprep.subr.mxu0 0.0
    %347 = vmatpush1.msra.mxu0 0.0
    %348 = vmatprep.subr.mxu0 0.0
    %349 = vmatpush1.msra.mxu0 0.0
    %350 = vmatprep.subr.mxu0 0.0
    %351 = vmatpush1.msra.mxu0 0.0
    %352 = vmatprep.subr.mxu0 0.0
    %353 = vmatpush1.msra.mxu0 0.0
    %354 = vmatprep.subr.mxu0 0.0
    %355 = vmatpush1.msra.mxu0 0.0
    %356 = vmatprep.subr.mxu0 0.0
    %357 = vmatpush1.msra.mxu0 0.0
    %358 = vmatprep.subr.mxu0 0.0
    %359 = vmatpush1.msra.mxu0 0.0
    %360 = vmatprep.subr.mxu0 0.0
    %361 = vmatpush1.msra.mxu0 0.0
    %362 = vmatprep.subr.mxu0 0.0
    %363 = vmatpush1.msra.mxu0 0.0
    %364 = vmatprep.subr.mxu0 0.0
    %365 = vmatpush1.msra.mxu0 0.0
    %366 = vmatprep.subr.mxu0 0.0
    %367 = vmatpush1.msra.mxu0 0.0
    %368 = vmatprep.subr.mxu0 0.0
    %369 = vmatpush1.msra.mxu0 0.0
    %370 = vmatprep.subr.mxu0 0.0
    %371 = vmatpush1.msra.mxu0 0.0
    %372 = vmatprep.mubr.f32.mxu0 0.0
    %373 = vmatmul.mubr.f32.gmra.mrb[0].mxu0 %v284
    %v374 = vpop.f32.mrb[0].mxu0
    %v375 = vadd.f32 %v306, %v374
    %v376 = vpop.f32.mrb[0].mxu0
    %377 = vdwg.mxu0
    %v378 = vmul.f32 %v375, 0.5
    %v379 = vmul.f32 %v375, 0.70710677
    %v380 = verf.f32.pop %v379
    %v381 = vadd.f32 %v380, 1.0
    %v382 = vmul.f32 %v378, %v381
    %v383 = vld [vmem:[#allocation11] sm:$0xff]
    %v384 = vld [vmem:[#allocation11 + $0x8] sm:$0xff]
    %v385 = vld [vmem:[#allocation11 + $0x10] sm:$0xff]
    %v386 = vld [vmem:[#allocation11 + $0x18] sm:$0xff]
    %v387 = vld [vmem:[#allocation11 + $0x20] sm:$0xff]
    %v388 = vld [vmem:[#allocation11 + $0x28] sm:$0xff]
    %v389 = vld [vmem:[#allocation11 + $0x30] sm:$0xff]
    %v390 = vld [vmem:[#allocation11 + $0x38] sm:$0xff]
    %v391 = vld [vmem:[#allocation11 + $0x40] sm:$0xff]
    %v392 = vld [vmem:[#allocation11 + $0x48] sm:$0xff]
    %v393 = vld [vmem:[#allocation11 + $0x50] sm:$0xff]
    %v394 = vld [vmem:[#allocation11 + $0x58] sm:$0xff]
    %v395 = vld [vmem:[#allocation11 + $0x60] sm:$0xff]
    %v396 = vld [vmem:[#allocation11 + $0x68] sm:$0xff]
    %v397 = vld [vmem:[#allocation11 + $0x70] sm:$0xff]
    %v398 = vld [vmem:[#allocation11 + $0x78] sm:$0xff]
    %v399 = vld [vmem:[%s11] sm:$0x1]
    %v401 = vlaneseq
    %v402 = vshrl.u32 %v401, 7
    %v403 = vsub.s32 0, %v402
    %v404 = vrot.slane %v399, %v403
    %406 = vmatprep.subr.mxu0 0.0
    %407 = vmatpush1.msra.mxu0 %v383
    %408 = vmatprep.subr.mxu0 0.0
    %409 = vmatpush1.msra.mxu0 %v384
    %410 = vmatprep.subr.mxu0 0.0
    %411 = vmatpush1.msra.mxu0 %v385
    %412 = vmatprep.subr.mxu0 0.0
    %413 = vmatpush1.msra.mxu0 %v386
    %414 = vmatprep.subr.mxu0 0.0
    %415 = vmatpush1.msra.mxu0 %v387
    %416 = vmatprep.subr.mxu0 0.0
    %417 = vmatpush1.msra.mxu0 %v388
    %418 = vmatprep.subr.mxu0 0.0
    %419 = vmatpush1.msra.mxu0 %v389
    %420 = vmatprep.subr.mxu0 0.0
    %421 = vmatpush1.msra.mxu0 %v390
    %422 = vmatprep.subr.mxu0 0.0
    %423 = vmatpush1.msra.mxu0 %v391
    %424 = vmatprep.subr.mxu0 0.0
    %425 = vmatpush1.msra.mxu0 %v392
    %426 = vmatprep.subr.mxu0 0.0
    %427 = vmatpush1.msra.mxu0 %v393
    %428 = vmatprep.subr.mxu0 0.0
    %429 = vmatpush1.msra.mxu0 %v394
    %430 = vmatprep.subr.mxu0 0.0
    %431 = vmatpush1.msra.mxu0 %v395
    %432 = vmatprep.subr.mxu0 0.0
    %433 = vmatpush1.msra.mxu0 %v396
    %434 = vmatprep.subr.mxu0 0.0
    %435 = vmatpush1.msra.mxu0 %v397
    %436 = vmatprep.subr.mxu0 0.0
    %437 = vmatpush1.msra.mxu0 %v398
    %438 = vmatprep.subr.mxu0 0.0
    %439 = vmatpush1.msra.mxu0 0.0
    %440 = vmatprep.subr.mxu0 0.0
    %441 = vmatpush1.msra.mxu0 0.0
    %442 = vmatprep.subr.mxu0 0.0
    %443 = vmatpush1.msra.mxu0 0.0
    %444 = vmatprep.subr.mxu0 0.0
    %445 = vmatpush1.msra.mxu0 0.0
    %446 = vmatprep.subr.mxu0 0.0
    %447 = vmatpush1.msra.mxu0 0.0
    %448 = vmatprep.subr.mxu0 0.0
    %449 = vmatpush1.msra.mxu0 0.0
    %450 = vmatprep.subr.mxu0 0.0
    %451 = vmatpush1.msra.mxu0 0.0
    %452 = vmatprep.subr.mxu0 0.0
    %453 = vmatpush1.msra.mxu0 0.0
    %454 = vmatprep.subr.mxu0 0.0
    %455 = vmatpush1.msra.mxu0 0.0
    %456 = vmatprep.subr.mxu0 0.0
    %457 = vmatpush1.msra.mxu0 0.0
    %458 = vmatprep.subr.mxu0 0.0
    %459 = vmatpush1.msra.mxu0 0.0
    %460 = vmatprep.subr.mxu0 0.0
    %461 = vmatpush1.msra.mxu0 0.0
    %462 = vmatprep.subr.mxu0 0.0
    %463 = vmatpush1.msra.mxu0 0.0
    %464 = vmatprep.subr.mxu0 0.0
    %465 = vmatpush1.msra.mxu0 0.0
    %466 = vmatprep.subr.mxu0 0.0
    %467 = vmatpush1.msra.mxu0 0.0
    %468 = vmatprep.subr.mxu0 0.0
    %469 = vmatpush1.msra.mxu0 0.0
    %470 = vmatprep.mubr.f32.mxu0 0.0
    %471 = vmatmul.mubr.f32.gmra.mrb[0].mxu0 %v382
    %v472 = vpop.f32.mrb[0].mxu0
    %v473 = vadd.f32 %v404, %v472
    %v474 = vpop.f32.mrb[0].mxu0
    %475 = vdwg.mxu0
    %476 = vst [vmem:[#allocation12] sm:$0xff] %v473
    // Predicated region
    $region70: #{tpu_custom_call.1} parent=1 // pred_check
      _
    $region71: #{tpu_custom_call.1} parent=1 // pred_check_branch
      %478 = sbr.rel (0) target = $region73
    $region72: #{tpu_custom_call.1} parent=1 // pred_region
      %s480 = ssub.s32 128, 128
      %481 = vsyncadd [#allocation5], %s480
      %s483 = sshll.u32 [#allocation12], 4
      %s484 = int_to_ptr.vmem [resolvable:$true] %s483
      %486 = dma.vmem_to_hbm [thread:$0]  %s484, 128, %s12, [#allocation5]
    $region73: #{tpu_custom_call.1} parent=1 // pred_fallthru
      _
    // Predicated region
    $region74: #{tpu_custom_call.1} parent=1 // pred_check
      _
    $region75: #{tpu_custom_call.1} parent=1 // pred_check_branch
      %488 = sbr.rel (0) target = $region77
    $region76: #{tpu_custom_call.1} parent=1 // pred_region
      %489 = dma.done [#allocation5], 128
    $region77: #{tpu_custom_call.1} parent=1 // pred_fallthru
      _
    %490 = vsyncpa [#allocation4], 1
    %491 = vsyncpa [#allocation7], 1
    %492 = vsyncpa [#allocation10], 1
    %493 = vsyncpa [#allocation5], 1

</llo_original>
